<compile_context>
chip_gen: v6e
topology: v6e:2x2x1
jax: 0.10.0
libtpu: 0.0.40
codegen_flags: <defaults>
</compile_context>

<pallas_src>
import functools

import jax
import jax.numpy as jnp
from jax import lax
from jax.experimental import pallas as pl
from jax.experimental.pallas import tpu as pltpu


def _round_up(x, m):
    return (x + m - 1) // m * m


# ----------------------------------------------------------------------------
# Kernel 1: stacked-LSTM recurrence over the full sequence
# ----------------------------------------------------------------------------
def _lstm_seq_kernel(x_ref, w_ref, b_ref, out_ref, *, n_layers, hidden_pad,
                     seq_len):
    """Runs the whole (padded) sequence in one invocation.

    x_ref   : (T, Bp, Ep)            time-major inputs (zero-padded)
    w_ref   : (L, Ep + Hp, 4*Hp)     fused [W_ih ; W_hh] per layer (padded)
    b_ref   : (L, 1, 4*Hp)           combined bias b_ih + b_hh (padded)
    out_ref : (T, Bp, Hp)            top-layer hidden state per time step
    """
    Hp = hidden_pad
    Bp = x_ref.shape[1]

    def step(t, carry):
        hs, cs = carry                      # tuples of (Bp, Hp) f32
        inp = x_ref[t]                      # (Bp, Ep)
        new_hs = []
        new_cs = []
        for l in range(n_layers):
            # One fused MXU matmul per layer per step.
            xh = jnp.concatenate([inp, hs[l]], axis=-1)       # (Bp, Ep+Hp)
            gates = jnp.dot(xh, w_ref[l],
                            preferred_element_type=jnp.float32) + b_ref[l]
            # PyTorch gate order: i, f, g, o — each slice is 128-lane aligned.
            i_g = jax.nn.sigmoid(gates[:, 0 * Hp:1 * Hp])
            f_g = jax.nn.sigmoid(gates[:, 1 * Hp:2 * Hp])
            g_g = jnp.tanh(gates[:, 2 * Hp:3 * Hp])
            o_g = jax.nn.sigmoid(gates[:, 3 * Hp:4 * Hp])

            c_new = f_g * cs[l] + i_g * g_g
            h_new = o_g * jnp.tanh(c_new)
            new_hs.append(h_new)
            new_cs.append(c_new)
            inp = h_new                    # feed next layer
        out_ref[t] = inp                   # top-layer hidden state
        return (tuple(new_hs), tuple(new_cs))

    zeros = tuple(jnp.zeros((Bp, Hp), jnp.float32) for _ in range(n_layers))
    lax.fori_loop(0, seq_len, step, (zeros, zeros))


# ----------------------------------------------------------------------------
# Kernel 2: deferred, lane-dense vocab projection  (T*Bp, Hp) @ (Hp, V-tile)
# ----------------------------------------------------------------------------
def _proj_kernel(h_ref, w_ref, b_ref, out_ref):
    out_ref[...] = (jnp.dot(h_ref[...], w_ref[...],
                            preferred_element_type=jnp.float32)
                    + b_ref[...]).astype(out_ref.dtype)


# ----------------------------------------------------------------------------
# Parameter packing: torch layout -> fused / padded kernel layout
# ----------------------------------------------------------------------------
def _pack_params(params):
    w_ih = params["w_ih"]                  # (L, 4H, E)   (E == H)
    w_hh = params["w_hh"]                  # (L, 4H, H)
    bias = params["b_ih"] + params["b_hh"]  # (L, 4H)
    w_out = params["w_out"]                # (V, H)
    b_out = params["b_out"]                # (V,)

    L, fourH, E = w_ih.shape
    H = fourH // 4
    V = w_out.shape[0]
    assert E == H, "stacked per-layer weights require emb_dim == hidden_size"

    Hp = _round_up(H, 128)
    Ep = Hp
    if V <= 2048:
        Vp = _round_up(V, 128)
        TV = Vp
    else:
        Vp = _round_up(V, 2048)
        TV = 2048

    wih_t = jnp.transpose(w_ih, (0, 2, 1))   # (L, E, 4H)
    whh_t = jnp.transpose(w_hh, (0, 2, 1))   # (L, H, 4H)

    # fused [W_ih ; W_hh] per layer, gate blocks padded to Hp lanes each
    w_f = jnp.zeros((L, Ep + Hp, 4 * Hp), jnp.float32)
    b_f = jnp.zeros((L, 1, 4 * Hp), jnp.float32)
    for g in range(4):
        w_f = w_f.at[:, :E, g * Hp:g * Hp + H].set(wih_t[:, :, g * H:(g + 1) * H])
        w_f = w_f.at[:, Ep:Ep + H, g * Hp:g * Hp + H].set(
            whh_t[:, :, g * H:(g + 1) * H])
        b_f = b_f.at[:, 0, g * Hp:g * Hp + H].set(bias[:, g * H:(g + 1) * H])

    w_out_p = jnp.zeros((Hp, Vp), jnp.float32).at[:H, :V].set(w_out.T)
    b_out_p = jnp.zeros((1, Vp), jnp.float32).at[0, :V].set(b_out)

    dims = dict(L=L, H=H, Hp=Hp, E=E, Ep=Ep, V=V, Vp=Vp, TV=TV)
    return w_f, b_f, w_out_p, b_out_p, dims


# ----------------------------------------------------------------------------
# Forward pass wrapper
# ----------------------------------------------------------------------------
def decoder_forward_pallas(embed_vector, caption, params):
    """embed_vector: (B, E) f32, caption: (B, S) int32 -> logits (B, S+1, V)."""
    word_emb = params["word_emb"]                       # (vocab, E)
    w_f, b_f, w_out_p, b_out_p, d = _pack_params(params)
    L, H, Hp, E, Ep, V, Vp, TV = (d["L"], d["H"], d["Hp"], d["E"], d["Ep"],
                                  d["V"], d["Vp"], d["TV"])

    B = embed_vector.shape[0]
    S = caption.shape[1]
    T = S + 1

    # --- glue: embedding lookup (gather), dropout == identity, concat ------
    # Build TIME-MAJOR directly (transpose of the tiny int caption, not of the
    # activation tensor).
    emb_cap_tm = word_emb[caption.T]                     # (S, B, E)
    x_tm = jnp.concatenate([embed_vector[None], emb_cap_tm], axis=0)  # (T,B,E)

    # sublane / lane padding
    Bp = _round_up(max(B, 8), 8)
    x_pad = jnp.zeros((T, Bp, Ep), jnp.float32).at[:, :B, :E].set(x_tm)

    # --- Kernel 1: recurrence, single grid step, loop over T in-kernel -----
    lstm_kernel = functools.partial(_lstm_seq_kernel, n_layers=L,
                                    hidden_pad=Hp, seq_len=T)
    h_top = pl.pallas_call(
        lstm_kernel,
        out_shape=jax.ShapeDtypeStruct((T, Bp, Hp), jnp.float32),
        grid=(1,),
        in_specs=[
            pl.BlockSpec((T, Bp, Ep), lambda i: (0, 0, 0)),           # x
            pl.BlockSpec((L, Ep + Hp, 4 * Hp), lambda i: (0, 0, 0)),  # W_fused
            pl.BlockSpec((L, 1, 4 * Hp), lambda i: (0, 0, 0)),        # bias
        ],
        out_specs=pl.BlockSpec((T, Bp, Hp), lambda i: (0, 0, 0)),
        compiler_params=pltpu.CompilerParams(
            dimension_semantics=("arbitrary",),   # recurrence is serial
        ),
    )(x_pad, w_f, b_f)

    # --- Kernel 2: deferred lane-dense vocab projection ---------------------
    R = T * Bp                                # rows; always a multiple of 8
    h_flat = h_top.reshape(R, Hp)             # free reshape (collapse leading)
    n_vt = Vp // TV
    logits_flat = pl.pallas_call(
        _proj_kernel,
        out_shape=jax.ShapeDtypeStruct((R, Vp), jnp.float32),
        grid=(n_vt,),
        in_specs=[
            pl.BlockSpec((R, Hp), lambda j: (0, 0)),     # h rows (all)
            pl.BlockSpec((Hp, TV), lambda j: (0, j)),    # W_out V-tile
            pl.BlockSpec((1, TV), lambda j: (0, j)),     # b_out V-tile
        ],
        out_specs=pl.BlockSpec((R, TV), lambda j: (0, j)),
        compiler_params=pltpu.CompilerParams(
            dimension_semantics=("parallel",),   # V-tiles are independent
        ),
    )(h_flat, w_out_p, b_out_p)

    logits_tm = logits_flat.reshape(T, Bp, Vp)[:, :B, :V]   # strip padding
    return jnp.transpose(logits_tm, (1, 0, 2))              # (B, T, V)


# ----------------------------------------------------------------------------
# Pure-JAX reference (lax.scan) of the same forward pass
# ----------------------------------------------------------------------------
def decoder_forward_ref(embed_vector, caption, params):
    word_emb = params["word_emb"]
    w_ih, w_hh = params["w_ih"], params["w_hh"]
    bias = params["b_ih"] + params["b_hh"]
    w_out, b_out = params["w_out"], params["b_out"]
    L, fourH, _ = w_ih.shape
    H = fourH // 4
    B = embed_vector.shape[0]

    embed_captions = word_emb[caption]
    inputs = jnp.concatenate([embed_vector[:, None, :], embed_captions], axis=1)
    x_seq = jnp.transpose(inputs, (1, 0, 2))  # (T, B, E)

    def step(carry, x_t):
        h, c = carry
        inp = x_t
        h_new, c_new = [], []
        for l in range(L):
            gates = inp @ w_ih[l].T + h[l] @ w_hh[l].T + bias[l]
            i_g = jax.nn.sigmoid(gates[:, 0 * H:1 * H])
            f_g = jax.nn.sigmoid(gates[:, 1 * H:2 * H])
            g_g = jnp.tanh(gates[:, 2 * H:3 * H])
            o_g = jax.nn.sigmoid(gates[:, 3 * H:4 * H])
            c_l = f_g * c[l] + i_g * g_g
            h_l = o_g * jnp.tanh(c_l)
            h_new.append(h_l)
            c_new.append(c_l)
            inp = h_l
        logits = inp @ w_out.T + b_out
        return (jnp.stack(h_new), jnp.stack(c_new)), logits

    init = (jnp.zeros((L, B, H)), jnp.zeros((L, B, H)))
    _, logits_tm = jax.lax.scan(step, init, x_seq)
    return jnp.transpose(logits_tm, (1, 0, 2))


# ----------------------------------------------------------------------------
# Deterministic synthetic parameters (PyTorch layouts / init ranges)
# ----------------------------------------------------------------------------
def init_params(key, vocab_size, emb_dim, hidden_size, n_layers):
    assert emb_dim == hidden_size, "kernel stacks per-layer weights; keep E == H"
    k = 1.0 / jnp.sqrt(hidden_size)
    keys = jax.random.split(key, 7)
    word_emb = jax.random.normal(keys[0], (vocab_size, emb_dim), jnp.float32)
    w_ih = jax.random.uniform(keys[1], (n_layers, 4 * hidden_size, emb_dim),
                              jnp.float32, -k, k)
    w_hh = jax.random.uniform(keys[2], (n_layers, 4 * hidden_size, hidden_size),
                              jnp.float32, -k, k)
    b_ih = jax.random.uniform(keys[3], (n_layers, 4 * hidden_size),
                              jnp.float32, -k, k)
    b_hh = jax.random.uniform(keys[4], (n_layers, 4 * hidden_size),
                              jnp.float32, -k, k)
    w_out = jax.random.uniform(keys[5], (vocab_size, hidden_size),
                               jnp.float32, -k, k)
    b_out = jax.random.uniform(keys[6], (vocab_size,), jnp.float32, -k, k)
    return {"word_emb": word_emb, "w_ih": w_ih, "w_hh": w_hh,
            "b_ih": b_ih, "b_hh": b_hh, "w_out": w_out, "b_out": b_out}


if __name__ == "__main__":
    batch = 2
    emb_dim = 32
    hidden_size = 32
    vocab_size = 64
    n_layers = 2
    max_sen_len = 8

    key = jax.random.PRNGKey(0)
    k_p, k_e, k_c = jax.random.split(key, 3)

    params = init_params(k_p, vocab_size, emb_dim, hidden_size, n_layers)
    embed_vector = jax.random.normal(k_e, (batch, emb_dim), jnp.float32)
    caption = jax.random.randint(k_c, (batch, max_sen_len), 0, vocab_size,
                                 dtype=jnp.int32)

    fwd = jax.jit(decoder_forward_pallas)
    logits = jax.block_until_ready(fwd(embed_vector, caption, params))

    ref = decoder_forward_ref(embed_vector, caption, params)
    assert logits.shape == (batch, max_sen_len + 1, vocab_size)
    assert jnp.allclose(logits, ref, atol=2e-4, rtol=2e-4), (
        "mismatch vs reference: max abs diff = "
        f"{float(jnp.max(jnp.abs(logits - ref)))}")

    print("KERNEL_OK")
</pallas_src>

<mosaic_0001>
module attributes {stable_mosaic.version = 11 : i64} {
  func.func @_lstm_seq_kernel(%arg0: i32, %arg1: memref<9x8x128xf32, #tpu.memory_space<vmem>>, %arg2: memref<2x256x512xf32, #tpu.memory_space<vmem>>, %arg3: memref<2x1x512xf32, #tpu.memory_space<vmem>>, %arg4: memref<9x8x128xf32, #tpu.memory_space<vmem>>) attributes {dimension_semantics = [#tpu.dimension_semantics<arbitrary>], iteration_bounds = array<i64: 1>, scalar_prefetch = 0 : i64, scratch_operands = 0 : i64, tpu.core_type = #tpu.core_type<tc>, window_params = [{pipeline_mode = #tpu.pipeline_mode<synchronous>, transform_indices = @transform_0, window_bounds = array<i64: 9, 8, 128>}, {pipeline_mode = #tpu.pipeline_mode<synchronous>, transform_indices = @transform_1, window_bounds = array<i64: 2, 256, 512>}, {pipeline_mode = #tpu.pipeline_mode<synchronous>, transform_indices = @transform_2, window_bounds = array<i64: 2, 1, 512>}, {pipeline_mode = #tpu.pipeline_mode<synchronous>, transform_indices = @transform_3, window_bounds = array<i64: 9, 8, 128>}]} {
    %cst = arith.constant 0.000000e+00 : f32
    %0 = vector.broadcast %cst : f32 to vector<8x128xf32>
    %cst_0 = arith.constant 0.000000e+00 : f32
    %1 = vector.broadcast %cst_0 : f32 to vector<8x128xf32>
    %c0_i32 = arith.constant 0 : i32
    %c9_i32 = arith.constant 9 : i32
    %2 = arith.addi %c0_i32, %c9_i32 : i32
    %c1_i32 = arith.constant 1 : i32
    %3:4 = scf.for %arg5 = %c0_i32 to %2 step %c1_i32 iter_args(%arg6 = %0, %arg7 = %1, %arg8 = %0, %arg9 = %1) -> (vector<8x128xf32>, vector<8x128xf32>, vector<8x128xf32>, vector<8x128xf32>)  : i32 {
      %4 = arith.index_cast %arg5 : i32 to index
      %c0 = arith.constant 0 : index
      %c0_2 = arith.constant 0 : index
      %5 = vector.load %arg1[%4, %c0, %c0_2] : memref<9x8x128xf32, #tpu.memory_space<vmem>>, vector<1x8x128xf32>
      %6 = vector.shape_cast %5 : vector<1x8x128xf32> to vector<8x128xf32>
      %7 = tpu.concatenate %6, %arg6 in 1 : vector<8x128xf32>, vector<8x128xf32> -> vector<8x256xf32>
      %c0_3 = arith.constant 0 : index
      %c0_4 = arith.constant 0 : index
      %c0_5 = arith.constant 0 : index
      %8 = vector.load %arg2[%c0_3, %c0_4, %c0_5] : memref<2x256x512xf32, #tpu.memory_space<vmem>>, vector<1x256x512xf32>
      %9 = vector.shape_cast %8 : vector<1x256x512xf32> to vector<256x512xf32>
      %cst_6 = arith.constant dense<0.000000e+00> : vector<8x512xf32>
      %10 = tpu.matmul %7, %9, %cst_6 {dimension_numbers = #tpu.dot_dimension_numbers<[1], [0], [0], [1], [0, 0, 1, 1], [], []>} : vector<8x256xf32>, vector<256x512xf32>, vector<8x512xf32> -> vector<8x512xf32>
      %c0_7 = arith.constant 0 : index
      %c0_8 = arith.constant 0 : index
      %c0_9 = arith.constant 0 : index
      %11 = vector.load %arg3[%c0_7, %c0_8, %c0_9] : memref<2x1x512xf32, #tpu.memory_space<vmem>>, vector<1x1x512xf32>
      %12 = vector.shape_cast %11 : vector<1x1x512xf32> to vector<1x512xf32>
      %13 = vector.broadcast %12 : vector<1x512xf32> to vector<8x512xf32>
      %14 = arith.addf %10, %13 : vector<8x512xf32>
      %15 = vector.extract_strided_slice %14 {offsets = [0, 0], sizes = [8, 128], strides = [1, 1]} : vector<8x512xf32> to vector<8x128xf32>
      %16 = arith.negf %15 : vector<8x128xf32>
      %17 = math.exp %16 : vector<8x128xf32>
      %cst_10 = arith.constant 1.000000e+00 : f32
      %18 = vector.broadcast %cst_10 : f32 to vector<8x128xf32>
      %19 = arith.addf %18, %17 : vector<8x128xf32>
      %20 = arith.divf %18, %19 : vector<8x128xf32>
      %21 = vector.extract_strided_slice %14 {offsets = [0, 128], sizes = [8, 128], strides = [1, 1]} : vector<8x512xf32> to vector<8x128xf32>
      %22 = arith.negf %21 : vector<8x128xf32>
      %23 = math.exp %22 : vector<8x128xf32>
      %cst_11 = arith.constant 1.000000e+00 : f32
      %24 = vector.broadcast %cst_11 : f32 to vector<8x128xf32>
      %25 = arith.addf %24, %23 : vector<8x128xf32>
      %26 = arith.divf %24, %25 : vector<8x128xf32>
      %27 = vector.extract_strided_slice %14 {offsets = [0, 256], sizes = [8, 128], strides = [1, 1]} : vector<8x512xf32> to vector<8x128xf32>
      %28 = math.tanh %27 : vector<8x128xf32>
      %29 = vector.extract_strided_slice %14 {offsets = [0, 384], sizes = [8, 128], strides = [1, 1]} : vector<8x512xf32> to vector<8x128xf32>
      %30 = arith.negf %29 : vector<8x128xf32>
      %31 = math.exp %30 : vector<8x128xf32>
      %cst_12 = arith.constant 1.000000e+00 : f32
      %32 = vector.broadcast %cst_12 : f32 to vector<8x128xf32>
      %33 = arith.addf %32, %31 : vector<8x128xf32>
      %34 = arith.divf %32, %33 : vector<8x128xf32>
      %35 = arith.mulf %26, %arg8 : vector<8x128xf32>
      %36 = arith.mulf %20, %28 : vector<8x128xf32>
      %37 = arith.addf %35, %36 : vector<8x128xf32>
      %38 = math.tanh %37 : vector<8x128xf32>
      %39 = arith.mulf %34, %38 : vector<8x128xf32>
      %40 = tpu.concatenate %39, %arg7 in 1 : vector<8x128xf32>, vector<8x128xf32> -> vector<8x256xf32>
      %c1 = arith.constant 1 : index
      %c0_13 = arith.constant 0 : index
      %c0_14 = arith.constant 0 : index
      %41 = vector.load %arg2[%c1, %c0_13, %c0_14] : memref<2x256x512xf32, #tpu.memory_space<vmem>>, vector<1x256x512xf32>
      %42 = vector.shape_cast %41 : vector<1x256x512xf32> to vector<256x512xf32>
      %cst_15 = arith.constant dense<0.000000e+00> : vector<8x512xf32>
      %43 = tpu.matmul %40, %42, %cst_15 {dimension_numbers = #tpu.dot_dimension_numbers<[1], [0], [0], [1], [0, 0, 1, 1], [], []>} : vector<8x256xf32>, vector<256x512xf32>, vector<8x512xf32> -> vector<8x512xf32>
      %c1_16 = arith.constant 1 : index
      %c0_17 = arith.constant 0 : index
      %c0_18 = arith.constant 0 : index
      %44 = vector.load %arg3[%c1_16, %c0_17, %c0_18] : memref<2x1x512xf32, #tpu.memory_space<vmem>>, vector<1x1x512xf32>
      %45 = vector.shape_cast %44 : vector<1x1x512xf32> to vector<1x512xf32>
      %46 = vector.broadcast %45 : vector<1x512xf32> to vector<8x512xf32>
      %47 = arith.addf %43, %46 : vector<8x512xf32>
      %48 = vector.extract_strided_slice %47 {offsets = [0, 0], sizes = [8, 128], strides = [1, 1]} : vector<8x512xf32> to vector<8x128xf32>
      %49 = arith.negf %48 : vector<8x128xf32>
      %50 = math.exp %49 : vector<8x128xf32>
      %cst_19 = arith.constant 1.000000e+00 : f32
      %51 = vector.broadcast %cst_19 : f32 to vector<8x128xf32>
      %52 = arith.addf %51, %50 : vector<8x128xf32>
      %53 = arith.divf %51, %52 : vector<8x128xf32>
      %54 = vector.extract_strided_slice %47 {offsets = [0, 128], sizes = [8, 128], strides = [1, 1]} : vector<8x512xf32> to vector<8x128xf32>
      %55 = arith.negf %54 : vector<8x128xf32>
      %56 = math.exp %55 : vector<8x128xf32>
      %cst_20 = arith.constant 1.000000e+00 : f32
      %57 = vector.broadcast %cst_20 : f32 to vector<8x128xf32>
      %58 = arith.addf %57, %56 : vector<8x128xf32>
      %59 = arith.divf %57, %58 : vector<8x128xf32>
      %60 = vector.extract_strided_slice %47 {offsets = [0, 256], sizes = [8, 128], strides = [1, 1]} : vector<8x512xf32> to vector<8x128xf32>
      %61 = math.tanh %60 : vector<8x128xf32>
      %62 = vector.extract_strided_slice %47 {offsets = [0, 384], sizes = [8, 128], strides = [1, 1]} : vector<8x512xf32> to vector<8x128xf32>
      %63 = arith.negf %62 : vector<8x128xf32>
      %64 = math.exp %63 : vector<8x128xf32>
      %cst_21 = arith.constant 1.000000e+00 : f32
      %65 = vector.broadcast %cst_21 : f32 to vector<8x128xf32>
      %66 = arith.addf %65, %64 : vector<8x128xf32>
      %67 = arith.divf %65, %66 : vector<8x128xf32>
      %68 = arith.mulf %59, %arg9 : vector<8x128xf32>
      %69 = arith.mulf %53, %61 : vector<8x128xf32>
      %70 = arith.addf %68, %69 : vector<8x128xf32>
      %71 = math.tanh %70 : vector<8x128xf32>
      %72 = arith.mulf %67, %71 : vector<8x128xf32>
      %73 = arith.index_cast %arg5 : i32 to index
      %c0_22 = arith.constant 0 : index
      %c0_23 = arith.constant 0 : index
      %74 = vector.load %arg4[%73, %c0_22, %c0_23] : memref<9x8x128xf32, #tpu.memory_space<vmem>>, vector<1x8x128xf32>
      %75 = vector.shape_cast %74 : vector<1x8x128xf32> to vector<8x128xf32>
      %76 = vector.shape_cast %72 : vector<8x128xf32> to vector<1x8x128xf32>
      tpu.vector_store %arg4[%73, %c0_22, %c0_23], %76 {strides = array<i32>} : memref<9x8x128xf32, #tpu.memory_space<vmem>>, vector<1x8x128xf32>,
      scf.yield %39, %72, %37, %70 : vector<8x128xf32>, vector<8x128xf32>, vector<8x128xf32>, vector<8x128xf32>
    }
    %c9_i32_1 = arith.constant 9 : i32
    return
  }
  func.func @transform_0(%arg0: i32) -> (i32, i32, i32) {
    %c0_i32 = arith.constant 0 : i32
    %c0_i32_0 = arith.constant 0 : i32
    %c0_i32_1 = arith.constant 0 : i32
    %c0_i32_2 = arith.constant 0 : i32
    return %c0_i32, %c0_i32_0, %c0_i32_1 : i32, i32, i32
  }
  func.func @transform_1(%arg0: i32) -> (i32, i32, i32) {
    %c0_i32 = arith.constant 0 : i32
    %c0_i32_0 = arith.constant 0 : i32
    %c0_i32_1 = arith.constant 0 : i32
    %c0_i32_2 = arith.constant 0 : i32
    return %c0_i32, %c0_i32_0, %c0_i32_1 : i32, i32, i32
  }
  func.func @transform_2(%arg0: i32) -> (i32, i32, i32) {
    %c0_i32 = arith.constant 0 : i32
    %c0_i32_0 = arith.constant 0 : i32
    %c0_i32_1 = arith.constant 0 : i32
    %c0_i32_2 = arith.constant 0 : i32
    return %c0_i32, %c0_i32_0, %c0_i32_1 : i32, i32, i32
  }
  func.func @transform_3(%arg0: i32) -> (i32, i32, i32) {
    %c0_i32 = arith.constant 0 : i32
    %c0_i32_0 = arith.constant 0 : i32
    %c0_i32_1 = arith.constant 0 : i32
    %c0_i32_2 = arith.constant 0 : i32
    return %c0_i32, %c0_i32_0, %c0_i32_1 : i32, i32, i32
  }
}

module attributes {stable_mosaic.version = 11 : i64} {
  func.func @_proj_kernel(%arg0: i32, %arg1: memref<72x128xf32, #tpu.memory_space<vmem>>, %arg2: memref<128x128xf32, #tpu.memory_space<vmem>>, %arg3: memref<1x128xf32, #tpu.memory_space<vmem>>, %arg4: memref<72x128xf32, #tpu.memory_space<vmem>>) attributes {dimension_semantics = [#tpu.dimension_semantics<parallel>], iteration_bounds = array<i64: 1>, scalar_prefetch = 0 : i64, scratch_operands = 0 : i64, tpu.core_type = #tpu.core_type<tc>, window_params = [{pipeline_mode = #tpu.pipeline_mode<synchronous>, transform_indices = @transform_0, window_bounds = array<i64: 72, 128>}, {transform_indices = @transform_1, window_bounds = array<i64: 128, 128>}, {transform_indices = @transform_2, window_bounds = array<i64: 1, 128>}, {transform_indices = @transform_3, window_bounds = array<i64: 72, 128>}]} {
    %c0 = arith.constant 0 : index
    %c0_0 = arith.constant 0 : index
    %0 = vector.load %arg1[%c0, %c0_0] : memref<72x128xf32, #tpu.memory_space<vmem>>, vector<72x128xf32>
    %c0_1 = arith.constant 0 : index
    %c0_2 = arith.constant 0 : index
    %1 = vector.load %arg2[%c0_1, %c0_2] : memref<128x128xf32, #tpu.memory_space<vmem>>, vector<128x128xf32>
    %cst = arith.constant dense<0.000000e+00> : vector<72x128xf32>
    %2 = tpu.matmul %0, %1, %cst {dimension_numbers = #tpu.dot_dimension_numbers<[1], [0], [0], [1], [0, 0, 1, 1], [], []>} : vector<72x128xf32>, vector<128x128xf32>, vector<72x128xf32> -> vector<72x128xf32>
    %c0_3 = arith.constant 0 : index
    %c0_4 = arith.constant 0 : index
    %3 = vector.load %arg3[%c0_3, %c0_4] : memref<1x128xf32, #tpu.memory_space<vmem>>, vector<1x128xf32>
    %4 = vector.broadcast %3 : vector<1x128xf32> to vector<72x128xf32>
    %5 = arith.addf %2, %4 : vector<72x128xf32>
    %c0_5 = arith.constant 0 : index
    %c0_6 = arith.constant 0 : index
    %6 = vector.load %arg4[%c0_5, %c0_6] : memref<72x128xf32, #tpu.memory_space<vmem>>, vector<72x128xf32>
    tpu.vector_store %arg4[%c0_5, %c0_6], %5 {strides = array<i32>} : memref<72x128xf32, #tpu.memory_space<vmem>>, vector<72x128xf32>,
    return
  }
  func.func @transform_0(%arg0: i32) -> (i32, i32) {
    %c0_i32 = arith.constant 0 : i32
    %c0_i32_0 = arith.constant 0 : i32
    %c0_i32_1 = arith.constant 0 : i32
    return %c0_i32, %c0_i32_0 : i32, i32
  }
  func.func @transform_1(%arg0: i32) -> (i32, i32) {
    %c0_i32 = arith.constant 0 : i32
    %c0_i32_0 = arith.constant 0 : i32
    return %c0_i32, %arg0 : i32, i32
  }
  func.func @transform_2(%arg0: i32) -> (i32, i32) {
    %c0_i32 = arith.constant 0 : i32
    %c0_i32_0 = arith.constant 0 : i32
    return %c0_i32, %arg0 : i32, i32
  }
  func.func @transform_3(%arg0: i32) -> (i32, i32) {
    %c0_i32 = arith.constant 0 : i32
    %c0_i32_0 = arith.constant 0 : i32
    return %c0_i32, %arg0 : i32, i32
  }
}

</mosaic_0001>

<llo_original>
// kernel: decoder_forward_pallas.3
$region0: #{decoder_forward_pallas.3}
  #allocation0 [shape = 'u32[]', space=smem, size = 0x4, offset = 0x4, fixed_abs, tag = 'smem constant byte address 0x4 - core index']
  #allocation1 [shape = 'u32[144,128]{1,0:T(1,128)}', space=vmem, size = 0x12000, scoped, tag = 'internal scratch']
  %s0 = inlined_call_operand.vmem [shape: f32[72,128], index: 0, kind: input, shape index: {}]
  %s1 = inlined_call_operand.vmem [shape: f32[128,128], index: 1, kind: input, shape index: {}]
  %s2 = inlined_call_operand.vmem [shape: f32[1,128], index: 2, kind: input, shape index: {}]
  %s3 = inlined_call_operand.vmem [shape: f32[72,128], index: 3, kind: output, shape index: {}]
  %s4 = sld [smem:[#allocation0]]
  $region22: #{decoder_forward_pallas.3} parent=0
    _
  %s6 = ssub.s32 1, %s4
  %s7 = scalar_select 0, %s6, %s4
  // Predicated region
  $region2: #{decoder_forward_pallas.3} parent=0 // pred_check
    _
  $region3: #{decoder_forward_pallas.3} parent=0 // pred_check_branch
    %9 = sbr.rel (0) target = $region5
  $region4: #{decoder_forward_pallas.3} parent=0 // pred_region
    _
  $region5: #{decoder_forward_pallas.3} parent=0 // pred_fallthru
    _
  // Predicated region
  $region6: #{decoder_forward_pallas.3} parent=0 // pred_check
    _
  $region7: #{decoder_forward_pallas.3} parent=0 // pred_check_branch
    %11 = sbr.rel (0) target = $region9
  $region8: #{decoder_forward_pallas.3} parent=0 // pred_region
    _
  $region9: #{decoder_forward_pallas.3} parent=0 // pred_fallthru
    _
  // Predicated region
  $region10: #{decoder_forward_pallas.3} parent=0 // pred_check
    _
  $region11: #{decoder_forward_pallas.3} parent=0 // pred_check_branch
    %13 = sbr.rel (0) target = $region13
  $region12: #{decoder_forward_pallas.3} parent=0 // pred_region
    _
  $region13: #{decoder_forward_pallas.3} parent=0 // pred_fallthru
    _
  %v14 = vld [vmem:[%s0] sm:$0xff]
  %v15 = vld [vmem:[%s0 + $0x8] sm:$0xff]
  %v16 = vld [vmem:[%s0 + $0x10] sm:$0xff]
  %v17 = vld [vmem:[%s0 + $0x18] sm:$0xff]
  %v18 = vld [vmem:[%s0 + $0x20] sm:$0xff]
  %v19 = vld [vmem:[%s0 + $0x28] sm:$0xff]
  %v20 = vld [vmem:[%s0 + $0x30] sm:$0xff]
  %v21 = vld [vmem:[%s0 + $0x38] sm:$0xff]
  %v22 = vld [vmem:[%s0 + $0x40] sm:$0xff]
  %v23 = vld [vmem:[%s1] sm:$0xff]
  %v24 = vld [vmem:[%s1 + $0x8] sm:$0xff]
  %v25 = vld [vmem:[%s1 + $0x10] sm:$0xff]
  %v26 = vld [vmem:[%s1 + $0x18] sm:$0xff]
  %v27 = vld [vmem:[%s1 + $0x20] sm:$0xff]
  %v28 = vld [vmem:[%s1 + $0x28] sm:$0xff]
  %v29 = vld [vmem:[%s1 + $0x30] sm:$0xff]
  %v30 = vld [vmem:[%s1 + $0x38] sm:$0xff]
  %v31 = vld [vmem:[%s1 + $0x40] sm:$0xff]
  %v32 = vld [vmem:[%s1 + $0x48] sm:$0xff]
  %v33 = vld [vmem:[%s1 + $0x50] sm:$0xff]
  %v34 = vld [vmem:[%s1 + $0x58] sm:$0xff]
  %v35 = vld [vmem:[%s1 + $0x60] sm:$0xff]
  %v36 = vld [vmem:[%s1 + $0x68] sm:$0xff]
  %v37 = vld [vmem:[%s1 + $0x70] sm:$0xff]
  %v38 = vld [vmem:[%s1 + $0x78] sm:$0xff]
  %v39 = vld [vmem:[%s2] sm:$0x1]
  %v41 = vlaneseq
  %v42 = vshrl.u32 %v41, 7
  %v43 = vsub.s32 0, %v42
  %v44 = vrot.slane %v39, %v43
  %46 = vmatprep.subr.mxu0 0.0
  %47 = vmatpush1.msra.mxu0 %v38
  %48 = vmatprep.subr.mxu0 0.0
  %49 = vmatpush1.msra.mxu0 %v37
  %50 = vmatprep.subr.mxu0 0.0
  %51 = vmatpush1.msra.mxu0 %v36
  %52 = vmatprep.subr.mxu0 0.0
  %53 = vmatpush1.msra.mxu0 %v35
  %54 = vmatprep.subr.mxu0 0.0
  %55 = vmatpush1.msra.mxu0 %v34
  %56 = vmatprep.subr.mxu0 0.0
  %57 = vmatpush1.msra.mxu0 %v33
  %58 = vmatprep.subr.mxu0 0.0
  %59 = vmatpush1.msra.mxu0 %v32
  %60 = vmatprep.subr.mxu0 0.0
  %61 = vmatpush1.msra.mxu0 %v31
  %62 = vmatprep.subr.mxu0 0.0
  %63 = vmatpush1.msra.mxu0 %v30
  %64 = vmatprep.subr.mxu0 0.0
  %65 = vmatpush1.msra.mxu0 %v29
  %66 = vmatprep.subr.mxu0 0.0
  %67 = vmatpush1.msra.mxu0 %v28
  %68 = vmatprep.subr.mxu0 0.0
  %69 = vmatpush1.msra.mxu0 %v27
  %70 = vmatprep.subr.mxu0 0.0
  %71 = vmatpush1.msra.mxu0 %v26
  %72 = vmatprep.subr.mxu0 0.0
  %73 = vmatpush1.msra.mxu0 %v25
  %74 = vmatprep.subr.mxu0 0.0
  %75 = vmatpush1.msra.mxu0 %v24
  %76 = vmatprep.subr.mxu0 0.0
  %77 = vmatpush1.msra.mxu0 %v23
  %78 = vmatprep.subr.mxu0 0.0
  %79 = vmatpush2.msra.mxu0 0.0
  %80 = vmatprep.subr.mxu0 0.0
  %81 = vmatpush2.msra.mxu0 0.0
  %82 = vmatprep.subr.mxu0 0.0
  %83 = vmatpush2.msra.mxu0 0.0
  %84 = vmatprep.subr.mxu0 0.0
  %85 = vmatpush2.msra.mxu0 0.0
  %86 = vmatprep.subr.mxu0 0.0
  %87 = vmatpush2.msra.mxu0 0.0
  %88 = vmatprep.subr.mxu0 0.0
  %89 = vmatpush2.msra.mxu0 0.0
  %90 = vmatprep.subr.mxu0 0.0
  %91 = vmatpush2.msra.mxu0 0.0
  %92 = vmatprep.subr.mxu0 0.0
  %93 = vmatpush2.msra.mxu0 0.0
  %94 = vmatprep.subr.mxu0 0.0
  %95 = vmatpush2.msra.mxu0 0.0
  %96 = vmatprep.subr.mxu0 0.0
  %97 = vmatpush2.msra.mxu0 0.0
  %98 = vmatprep.subr.mxu0 0.0
  %99 = vmatpush2.msra.mxu0 0.0
  %100 = vmatprep.subr.mxu0 0.0
  %101 = vmatpush2.msra.mxu0 0.0
  %102 = vmatprep.subr.mxu0 0.0
  %103 = vmatpush2.msra.mxu0 0.0
  %104 = vmatprep.subr.mxu0 0.0
  %105 = vmatpush2.msra.mxu0 0.0
  %106 = vmatprep.subr.mxu0 0.0
  %107 = vmatpush2.msra.mxu0 0.0
  %108 = vmatprep.subr.mxu0 0.0
  %109 = vmatpush2.msra.mxu0 0.0
  %110 = vmatprep.mubr.f32.mxu0 0.0
  %111 = vmatmul.mubr.f32.gmra.mxu0 %v14
  %v112 = vpop.f32.mrf.mxu0
  %v113 = vadd.f32 %v44, %v112
  %v114 = vpop.f32.mrf.mxu0
  %115 = vmatprep.mubr.f32.mxu0 0.0
  %116 = vmatmul.mubr.f32.gmra.mxu0 %v15
  %v117 = vpop.f32.mrf.mxu0
  %v118 = vadd.f32 %v44, %v117
  %v119 = vpop.f32.mrf.mxu0
  %120 = vmatprep.mubr.f32.mxu0 0.0
  %121 = vmatmul.mubr.f32.gmra.mxu0 %v16
  %v122 = vpop.f32.mrf.mxu0
  %v123 = vadd.f32 %v44, %v122
  %v124 = vpop.f32.mrf.mxu0
  %125 = vmatprep.mubr.f32.mxu0 0.0
  %126 = vmatmul.mubr.f32.gmra.mxu0 %v17
  %v127 = vpop.f32.mrf.mxu0
  %v128 = vadd.f32 %v44, %v127
  %v129 = vpop.f32.mrf.mxu0
  %130 = vmatprep.mubr.f32.mxu0 0.0
  %131 = vmatmul.mubr.f32.gmra.mxu0 %v18
  %v132 = vpop.f32.mrf.mxu0
  %v133 = vadd.f32 %v44, %v132
  %v134 = vpop.f32.mrf.mxu0
  %135 = vmatprep.mubr.f32.mxu0 0.0
  %136 = vmatmul.mubr.f32.gmra.mxu0 %v19
  %v137 = vpop.f32.mrf.mxu0
  %v138 = vadd.f32 %v44, %v137
  %v139 = vpop.f32.mrf.mxu0
  %140 = vmatprep.mubr.f32.mxu0 0.0
  %141 = vmatmul.mubr.f32.gmra.mxu0 %v20
  %v142 = vpop.f32.mrf.mxu0
  %v143 = vadd.f32 %v44, %v142
  %v144 = vpop.f32.mrf.mxu0
  %145 = vmatprep.mubr.f32.mxu0 0.0
  %146 = vmatmul.mubr.f32.gmra.mxu0 %v21
  %v147 = vpop.f32.mrf.mxu0
  %v148 = vadd.f32 %v44, %v147
  %v149 = vpop.f32.mrf.mxu0
  %150 = vmatprep.mubr.f32.mxu0 0.0
  %151 = vmatmul.mubr.f32.gmra.mxu0 %v22
  %v152 = vpop.f32.mrf.mxu0
  %v153 = vadd.f32 %v44, %v152
  %v154 = vpop.f32.mrf.mxu0
  %155 = vdwg.mxu0
  %156 = vst [vmem:[%s3] sm:$0xff] %v113
  %157 = vst [vmem:[%s3 + $0x8] sm:$0xff] %v118
  %158 = vst [vmem:[%s3 + $0x10] sm:$0xff] %v123
  %159 = vst [vmem:[%s3 + $0x18] sm:$0xff] %v128
  %160 = vst [vmem:[%s3 + $0x20] sm:$0xff] %v133
  %161 = vst [vmem:[%s3 + $0x28] sm:$0xff] %v138
  %162 = vst [vmem:[%s3 + $0x30] sm:$0xff] %v143
  %163 = vst [vmem:[%s3 + $0x38] sm:$0xff] %v148
  %164 = vst [vmem:[%s3 + $0x40] sm:$0xff] %v153
  // Predicated region
  $region14: #{decoder_forward_pallas.3} parent=0 // pred_check
    _
  $region15: #{decoder_forward_pallas.3} parent=0 // pred_check_branch
    %166 = sbr.rel (0) target = $region17
  $region16: #{decoder_forward_pallas.3} parent=0 // pred_region
    _
  $region17: #{decoder_forward_pallas.3} parent=0 // pred_fallthru
    _
  // Predicated region
  $region18: #{decoder_forward_pallas.3} parent=0 // pred_check
    _
  $region19: #{decoder_forward_pallas.3} parent=0 // pred_check_branch
    %168 = sbr.rel (0) target = $region21
  $region20: #{decoder_forward_pallas.3} parent=0 // pred_region
    _
  $region21: #{decoder_forward_pallas.3} parent=0 // pred_fallthru
    _

// kernel: decoder_forward_pallas.2
$region0: #{decoder_forward_pallas.2}
  #allocation0 [shape = 'u32[]', space=smem, size = 0x4, offset = 0x4, fixed_abs, tag = 'smem constant byte address 0x4 - core index']
  #allocation1 [shape = 'u32[144,128]{1,0:T(1,128)}', space=vmem, size = 0x12000, scoped, tag = 'internal scratch']
  %s0 = inlined_call_operand.vmem [shape: f32[9,8,128], index: 0, kind: input, shape index: {}]
  %s1 = inlined_call_operand.vmem [shape: f32[2,256,512], index: 1, kind: input, shape index: {}]
  %s2 = inlined_call_operand.vmem [shape: f32[2,1,512], index: 2, kind: input, shape index: {}]
  %s3 = inlined_call_operand.vmem [shape: f32[9,8,128], index: 3, kind: output, shape index: {}]
  %s4 = sld [smem:[#allocation0]]
  $region29: #{decoder_forward_pallas.2} parent=0
    _
  %s6 = ssub.s32 1, %s4
  %s7 = scalar_select 0, %s6, %s4
  // Predicated region
  $region2: #{decoder_forward_pallas.2} parent=0 // pred_check
    _
  $region3: #{decoder_forward_pallas.2} parent=0 // pred_check_branch
    %9 = sbr.rel (0) target = $region5
  $region4: #{decoder_forward_pallas.2} parent=0 // pred_region
    _
  $region5: #{decoder_forward_pallas.2} parent=0 // pred_fallthru
    _
  // Predicated region
  $region6: #{decoder_forward_pallas.2} parent=0 // pred_check
    _
  $region7: #{decoder_forward_pallas.2} parent=0 // pred_check_branch
    %11 = sbr.rel (0) target = $region9
  $region8: #{decoder_forward_pallas.2} parent=0 // pred_region
    _
  $region9: #{decoder_forward_pallas.2} parent=0 // pred_fallthru
    _
  // Predicated region
  $region10: #{decoder_forward_pallas.2} parent=0 // pred_check
    _
  $region11: #{decoder_forward_pallas.2} parent=0 // pred_check_branch
    %13 = sbr.rel (0) target = $region13
  $region12: #{decoder_forward_pallas.2} parent=0 // pred_region
    _
  $region13: #{decoder_forward_pallas.2} parent=0 // pred_fallthru
    _
  loop: start=0, step=1, limit=9
  $region14: #{decoder_forward_pallas.2} parent=0 // loop_pre_header
    _
  $region15: #{decoder_forward_pallas.2} parent=0 // loop_header
    %s15 = sphi 0, %s19
    %p16 = scmp.ge.s32.totalorder %s15, 9
    %v20 = vphi 0.0, %v342
    %v21 = vphi 0.0, %v660
    %v22 = vphi 0.0, %v340
    %v23 = vphi 0.0, %v658
  $region16: #{decoder_forward_pallas.2} parent=0 // loop_header_branch
    %18 = sbr.rel (%p16) target = $region20
  $region17: #{decoder_forward_pallas.2} parent=0 // loop_body
    %s24 = smul.u32 %s15, 8
    %s25 = scalar_lea.vmem %s0, %s24
    %v26 = vld [vmem:[%s25] sm:$0xff]
    %v27 = vld [vmem:[%s1] sm:$0xff]
    %v28 = vld [vmem:[%s1 + $0x8] sm:$0xff]
    %v29 = vld [vmem:[%s1 + $0x10] sm:$0xff]
    %v30 = vld [vmem:[%s1 + $0x18] sm:$0xff]
    %v31 = vld [vmem:[%s1 + $0x20] sm:$0xff]
    %v32 = vld [vmem:[%s1 + $0x28] sm:$0xff]
    %v33 = vld [vmem:[%s1 + $0x30] sm:$0xff]
    %v34 = vld [vmem:[%s1 + $0x38] sm:$0xff]
    %v35 = vld [vmem:[%s1 + $0x40] sm:$0xff]
    %v36 = vld [vmem:[%s1 + $0x48] sm:$0xff]
    %v37 = vld [vmem:[%s1 + $0x50] sm:$0xff]
    %v38 = vld [vmem:[%s1 + $0x58] sm:$0xff]
    %v39 = vld [vmem:[%s1 + $0x60] sm:$0xff]
    %v40 = vld [vmem:[%s1 + $0x68] sm:$0xff]
    %v41 = vld [vmem:[%s1 + $0x70] sm:$0xff]
    %v42 = vld [vmem:[%s1 + $0x78] sm:$0xff]
    %v43 = vld [vmem:[%s1 + $0x80] sm:$0xff]
    %v44 = vld [vmem:[%s1 + $0x88] sm:$0xff]
    %v45 = vld [vmem:[%s1 + $0x90] sm:$0xff]
    %v46 = vld [vmem:[%s1 + $0x98] sm:$0xff]
    %v47 = vld [vmem:[%s1 + $0xa0] sm:$0xff]
    %v48 = vld [vmem:[%s1 + $0xa8] sm:$0xff]
    %v49 = vld [vmem:[%s1 + $0xb0] sm:$0xff]
    %v50 = vld [vmem:[%s1 + $0xb8] sm:$0xff]
    %v51 = vld [vmem:[%s1 + $0xc0] sm:$0xff]
    %v52 = vld [vmem:[%s1 + $0xc8] sm:$0xff]
    %v53 = vld [vmem:[%s1 + $0xd0] sm:$0xff]
    %v54 = vld [vmem:[%s1 + $0xd8] sm:$0xff]
    %v55 = vld [vmem:[%s1 + $0xe0] sm:$0xff]
    %v56 = vld [vmem:[%s1 + $0xe8] sm:$0xff]
    %v57 = vld [vmem:[%s1 + $0xf0] sm:$0xff]
    %v58 = vld [vmem:[%s1 + $0xf8] sm:$0xff]
    %v59 = vld [vmem:[%s1 + $0x100] sm:$0xff]
    %v60 = vld [vmem:[%s1 + $0x108] sm:$0xff]
    %v61 = vld [vmem:[%s1 + $0x110] sm:$0xff]
    %v62 = vld [vmem:[%s1 + $0x118] sm:$0xff]
    %v63 = vld [vmem:[%s1 + $0x120] sm:$0xff]
    %v64 = vld [vmem:[%s1 + $0x128] sm:$0xff]
    %v65 = vld [vmem:[%s1 + $0x130] sm:$0xff]
    %v66 = vld [vmem:[%s1 + $0x138] sm:$0xff]
    %v67 = vld [vmem:[%s1 + $0x140] sm:$0xff]
    %v68 = vld [vmem:[%s1 + $0x148] sm:$0xff]
    %v69 = vld [vmem:[%s1 + $0x150] sm:$0xff]
    %v70 = vld [vmem:[%s1 + $0x158] sm:$0xff]
    %v71 = vld [vmem:[%s1 + $0x160] sm:$0xff]
    %v72 = vld [vmem:[%s1 + $0x168] sm:$0xff]
    %v73 = vld [vmem:[%s1 + $0x170] sm:$0xff]
    %v74 = vld [vmem:[%s1 + $0x178] sm:$0xff]
    %v75 = vld [vmem:[%s1 + $0x180] sm:$0xff]
    %v76 = vld [vmem:[%s1 + $0x188] sm:$0xff]
    %v77 = vld [vmem:[%s1 + $0x190] sm:$0xff]
    %v78 = vld [vmem:[%s1 + $0x198] sm:$0xff]
    %v79 = vld [vmem:[%s1 + $0x1a0] sm:$0xff]
    %v80 = vld [vmem:[%s1 + $0x1a8] sm:$0xff]
    %v81 = vld [vmem:[%s1 + $0x1b0] sm:$0xff]
    %v82 = vld [vmem:[%s1 + $0x1b8] sm:$0xff]
    %v83 = vld [vmem:[%s1 + $0x1c0] sm:$0xff]
    %v84 = vld [vmem:[%s1 + $0x1c8] sm:$0xff]
    %v85 = vld [vmem:[%s1 + $0x1d0] sm:$0xff]
    %v86 = vld [vmem:[%s1 + $0x1d8] sm:$0xff]
    %v87 = vld [vmem:[%s1 + $0x1e0] sm:$0xff]
    %v88 = vld [vmem:[%s1 + $0x1e8] sm:$0xff]
    %v89 = vld [vmem:[%s1 + $0x1f0] sm:$0xff]
    %v90 = vld [vmem:[%s1 + $0x1f8] sm:$0xff]
    %v91 = vld [vmem:[%s1 + $0x200] sm:$0xff]
    %v92 = vld [vmem:[%s1 + $0x208] sm:$0xff]
    %v93 = vld [vmem:[%s1 + $0x210] sm:$0xff]
    %v94 = vld [vmem:[%s1 + $0x218] sm:$0xff]
    %v95 = vld [vmem:[%s1 + $0x220] sm:$0xff]
    %v96 = vld [vmem:[%s1 + $0x228] sm:$0xff]
    %v97 = vld [vmem:[%s1 + $0x230] sm:$0xff]
    %v98 = vld [vmem:[%s1 + $0x238] sm:$0xff]
    %v99 = vld [vmem:[%s1 + $0x240] sm:$0xff]
    %v100 = vld [vmem:[%s1 + $0x248] sm:$0xff]
    %v101 = vld [vmem:[%s1 + $0x250] sm:$0xff]
    %v102 = vld [vmem:[%s1 + $0x258] sm:$0xff]
    %v103 = vld [vmem:[%s1 + $0x260] sm:$0xff]
    %v104 = vld [vmem:[%s1 + $0x268] sm:$0xff]
    %v105 = vld [vmem:[%s1 + $0x270] sm:$0xff]
    %v106 = vld [vmem:[%s1 + $0x278] sm:$0xff]
    %v107 = vld [vmem:[%s1 + $0x280] sm:$0xff]
    %v108 = vld [vmem:[%s1 + $0x288] sm:$0xff]
    %v109 = vld [vmem:[%s1 + $0x290] sm:$0xff]
    %v110 = vld [vmem:[%s1 + $0x298] sm:$0xff]
    %v111 = vld [vmem:[%s1 + $0x2a0] sm:$0xff]
    %v112 = vld [vmem:[%s1 + $0x2a8] sm:$0xff]
    %v113 = vld [vmem:[%s1 + $0x2b0] sm:$0xff]
    %v114 = vld [vmem:[%s1 + $0x2b8] sm:$0xff]
    %v115 = vld [vmem:[%s1 + $0x2c0] sm:$0xff]
    %v116 = vld [vmem:[%s1 + $0x2c8] sm:$0xff]
    %v117 = vld [vmem:[%s1 + $0x2d0] sm:$0xff]
    %v118 = vld [vmem:[%s1 + $0x2d8] sm:$0xff]
    %v119 = vld [vmem:[%s1 + $0x2e0] sm:$0xff]
    %v120 = vld [vmem:[%s1 + $0x2e8] sm:$0xff]
    %v121 = vld [vmem:[%s1 + $0x2f0] sm:$0xff]
    %v122 = vld [vmem:[%s1 + $0x2f8] sm:$0xff]
    %v123 = vld [vmem:[%s1 + $0x300] sm:$0xff]
    %v124 = vld [vmem:[%s1 + $0x308] sm:$0xff]
    %v125 = vld [vmem:[%s1 + $0x310] sm:$0xff]
    %v126 = vld [vmem:[%s1 + $0x318] sm:$0xff]
    %v127 = vld [vmem:[%s1 + $0x320] sm:$0xff]
    %v128 = vld [vmem:[%s1 + $0x328] sm:$0xff]
    %v129 = vld [vmem:[%s1 + $0x330] sm:$0xff]
    %v130 = vld [vmem:[%s1 + $0x338] sm:$0xff]
    %v131 = vld [vmem:[%s1 + $0x340] sm:$0xff]
    %v132 = vld [vmem:[%s1 + $0x348] sm:$0xff]
    %v133 = vld [vmem:[%s1 + $0x350] sm:$0xff]
    %v134 = vld [vmem:[%s1 + $0x358] sm:$0xff]
    %v135 = vld [vmem:[%s1 + $0x360] sm:$0xff]
    %v136 = vld [vmem:[%s1 + $0x368] sm:$0xff]
    %v137 = vld [vmem:[%s1 + $0x370] sm:$0xff]
    %v138 = vld [vmem:[%s1 + $0x378] sm:$0xff]
    %v139 = vld [vmem:[%s1 + $0x380] sm:$0xff]
    %v140 = vld [vmem:[%s1 + $0x388] sm:$0xff]
    %v141 = vld [vmem:[%s1 + $0x390] sm:$0xff]
    %v142 = vld [vmem:[%s1 + $0x398] sm:$0xff]
    %v143 = vld [vmem:[%s1 + $0x3a0] sm:$0xff]
    %v144 = vld [vmem:[%s1 + $0x3a8] sm:$0xff]
    %v145 = vld [vmem:[%s1 + $0x3b0] sm:$0xff]
    %v146 = vld [vmem:[%s1 + $0x3b8] sm:$0xff]
    %v147 = vld [vmem:[%s1 + $0x3c0] sm:$0xff]
    %v148 = vld [vmem:[%s1 + $0x3c8] sm:$0xff]
    %v149 = vld [vmem:[%s1 + $0x3d0] sm:$0xff]
    %v150 = vld [vmem:[%s1 + $0x3d8] sm:$0xff]
    %v151 = vld [vmem:[%s1 + $0x3e0] sm:$0xff]
    %v152 = vld [vmem:[%s1 + $0x3e8] sm:$0xff]
    %v153 = vld [vmem:[%s1 + $0x3f0] sm:$0xff]
    %v154 = vld [vmem:[%s1 + $0x3f8] sm:$0xff]
    %v155 = vld [vmem:[%s2] sm:$0xf]
    %v157 = vlaneseq
    %v158 = vshrl.u32 %v157, 7
    %v159 = vsub.s32 0, %v158
    %v160 = vrot.slane %v155, %v159
    %v161 = vlaneseq
    %v162 = vshrl.u32 %v161, 7
    %v163 = vsub.s32 1, %v162
    %v164 = vrot.slane %v155, %v163
    %v165 = vlaneseq
    %v166 = vshrl.u32 %v165, 7
    %v167 = vsub.s32 2, %v166
    %v168 = vrot.slane %v155, %v167
    %v169 = vlaneseq
    %v170 = vshrl.u32 %v169, 7
    %v171 = vsub.s32 3, %v170
    %v172 = vrot.slane %v155, %v171
    %177 = vmatprep.subr.mxu0 %v88
    %178 = vmatpush1.msra.mxu0 %v87
    %179 = vmatprep.subr.mxu0 %v84
    %180 = vmatpush1.msra.mxu0 %v83
    %181 = vmatprep.subr.mxu0 %v80
    %182 = vmatpush1.msra.mxu0 %v79
    %183 = vmatprep.subr.mxu0 %v76
    %184 = vmatpush1.msra.mxu0 %v75
    %185 = vmatprep.subr.mxu0 %v72
    %186 = vmatpush1.msra.mxu0 %v71
    %187 = vmatprep.subr.mxu0 %v68
    %188 = vmatpush1.msra.mxu0 %v67
    %189 = vmatprep.subr.mxu0 %v64
    %190 = vmatpush1.msra.mxu0 %v63
    %191 = vmatprep.subr.mxu0 %v60
    %192 = vmatpush1.msra.mxu0 %v59
    %193 = vmatprep.subr.mxu0 %v56
    %194 = vmatpush1.msra.mxu0 %v55
    %195 = vmatprep.subr.mxu0 %v52
    %196 = vmatpush1.msra.mxu0 %v51
    %197 = vmatprep.subr.mxu0 %v48
    %198 = vmatpush1.msra.mxu0 %v47
    %199 = vmatprep.subr.mxu0 %v44
    %200 = vmatpush1.msra.mxu0 %v43
    %201 = vmatprep.subr.mxu0 %v40
    %202 = vmatpush1.msra.mxu0 %v39
    %203 = vmatprep.subr.mxu0 %v36
    %204 = vmatpush1.msra.mxu0 %v35
    %205 = vmatprep.subr.mxu0 %v32
    %206 = vmatpush1.msra.mxu0 %v31
    %207 = vmatprep.subr.mxu0 %v28
    %208 = vmatpush1.msra.mxu0 %v27
    %209 = vmatprep.subr.mxu0 %v152
    %210 = vmatpush2.msra.mxu0 %v151
    %211 = vmatprep.subr.mxu0 %v148
    %212 = vmatpush2.msra.mxu0 %v147
    %213 = vmatprep.subr.mxu0 %v144
    %214 = vmatpush2.msra.mxu0 %v143
    %215 = vmatprep.subr.mxu0 %v140
    %216 = vmatpush2.msra.mxu0 %v139
    %217 = vmatprep.subr.mxu0 %v136
    %218 = vmatpush2.msra.mxu0 %v135
    %219 = vmatprep.subr.mxu0 %v132
    %220 = vmatpush2.msra.mxu0 %v131
    %221 = vmatprep.subr.mxu0 %v128
    %222 = vmatpush2.msra.mxu0 %v127
    %223 = vmatprep.subr.mxu0 %v124
    %224 = vmatpush2.msra.mxu0 %v123
    %225 = vmatprep.subr.mxu0 %v120
    %226 = vmatpush2.msra.mxu0 %v119
    %227 = vmatprep.subr.mxu0 %v116
    %228 = vmatpush2.msra.mxu0 %v115
    %229 = vmatprep.subr.mxu0 %v112
    %230 = vmatpush2.msra.mxu0 %v111
    %231 = vmatprep.subr.mxu0 %v108
    %232 = vmatpush2.msra.mxu0 %v107
    %233 = vmatprep.subr.mxu0 %v104
    %234 = vmatpush2.msra.mxu0 %v103
    %235 = vmatprep.subr.mxu0 %v100
    %236 = vmatpush2.msra.mxu0 %v99
    %237 = vmatprep.subr.mxu0 %v96
    %238 = vmatpush2.msra.mxu0 %v95
    %239 = vmatprep.subr.mxu0 %v92
    %240 = vmatpush2.msra.mxu0 %v91
    %241 = vmatprep.mubr.f32.mxu0 %v20
    %242 = vmatmul.mubr.f32.gmra.mxu0 %v26
    %v243 = vpop.f32.mrf.mxu0
    %v244 = vadd.f32 %v160, %v243
    %v245 = vpop.f32.mrf.mxu0
    %v246 = vadd.f32 %v164, %v245
    %247 = vdwg.mxu0
    %248 = vmatprep.subr.mxu0 %v90
    %249 = vmatpush1.msra.mxu0 %v89
    %250 = vmatprep.subr.mxu0 %v86
    %251 = vmatpush1.msra.mxu0 %v85
    %252 = vmatprep.subr.mxu0 %v82
    %253 = vmatpush1.msra.mxu0 %v81
    %254 = vmatprep.subr.mxu0 %v78
    %255 = vmatpush1.msra.mxu0 %v77
    %256 = vmatprep.subr.mxu0 %v74
    %257 = vmatpush1.msra.mxu0 %v73
    %258 = vmatprep.subr.mxu0 %v70
    %259 = vmatpush1.msra.mxu0 %v69
    %260 = vmatprep.subr.mxu0 %v66
    %261 = vmatpush1.msra.mxu0 %v65
    %262 = vmatprep.subr.mxu0 %v62
    %263 = vmatpush1.msra.mxu0 %v61
    %264 = vmatprep.subr.mxu0 %v58
    %265 = vmatpush1.msra.mxu0 %v57
    %266 = vmatprep.subr.mxu0 %v54
    %267 = vmatpush1.msra.mxu0 %v53
    %268 = vmatprep.subr.mxu0 %v50
    %269 = vmatpush1.msra.mxu0 %v49
    %270 = vmatprep.subr.mxu0 %v46
    %271 = vmatpush1.msra.mxu0 %v45
    %272 = vmatprep.subr.mxu0 %v42
    %273 = vmatpush1.msra.mxu0 %v41
    %274 = vmatprep.subr.mxu0 %v38
    %275 = vmatpush1.msra.mxu0 %v37
    %276 = vmatprep.subr.mxu0 %v34
    %277 = vmatpush1.msra.mxu0 %v33
    %278 = vmatprep.subr.mxu0 %v30
    %279 = vmatpush1.msra.mxu0 %v29
    %280 = vmatprep.subr.mxu0 %v154
    %281 = vmatpush2.msra.mxu0 %v153
    %282 = vmatprep.subr.mxu0 %v150
    %283 = vmatpush2.msra.mxu0 %v149
    %284 = vmatprep.subr.mxu0 %v146
    %285 = vmatpush2.msra.mxu0 %v145
    %286 = vmatprep.subr.mxu0 %v142
    %287 = vmatpush2.msra.mxu0 %v141
    %288 = vmatprep.subr.mxu0 %v138
    %289 = vmatpush2.msra.mxu0 %v137
    %290 = vmatprep.subr.mxu0 %v134
    %291 = vmatpush2.msra.mxu0 %v133
    %292 = vmatprep.subr.mxu0 %v130
    %293 = vmatpush2.msra.mxu0 %v129
    %294 = vmatprep.subr.mxu0 %v126
    %295 = vmatpush2.msra.mxu0 %v125
    %296 = vmatprep.subr.mxu0 %v122
    %297 = vmatpush2.msra.mxu0 %v121
    %298 = vmatprep.subr.mxu0 %v118
    %299 = vmatpush2.msra.mxu0 %v117
    %300 = vmatprep.subr.mxu0 %v114
    %301 = vmatpush2.msra.mxu0 %v113
    %302 = vmatprep.subr.mxu0 %v110
    %303 = vmatpush2.msra.mxu0 %v109
    %304 = vmatprep.subr.mxu0 %v106
    %305 = vmatpush2.msra.mxu0 %v105
    %306 = vmatprep.subr.mxu0 %v102
    %307 = vmatpush2.msra.mxu0 %v101
    %308 = vmatprep.subr.mxu0 %v98
    %309 = vmatpush2.msra.mxu0 %v97
    %310 = vmatprep.subr.mxu0 %v94
    %311 = vmatpush2.msra.mxu0 %v93
    %312 = vmatprep.mubr.f32.mxu0 %v20
    %313 = vmatmul.mubr.f32.gmra.mxu0 %v26
    %v314 = vpop.f32.mrf.mxu0
    %v315 = vadd.f32 %v168, %v314
    %v316 = vpop.f32.mrf.mxu0
    %v317 = vadd.f32 %v172, %v316
    %318 = vdwg.mxu0
    %v319 = vxor.u32 %v244, 2147483648
    %v320 = vmul.f32 %v319, 1.442695
    %v321 = vpow.pop %v320
    %v322 = vadd.f32 %v321, 1.0
    %v323 = vrcp.pop %v322
    %v324 = vmul.f32 1.0, %v323
    %v325 = vxor.u32 %v246, 2147483648
    %v326 = vmul.f32 %v325, 1.442695
    %v327 = vpow.pop %v326
    %v328 = vadd.f32 %v327, 1.0
    %v329 = vrcp.pop %v328
    %v330 = vmul.f32 1.0, %v329
    %v331 = vtanh.pop %v315
    %v332 = vxor.u32 %v317, 2147483648
    %v333 = vmul.f32 %v332, 1.442695
    %v334 = vpow.pop %v333
    %v335 = vadd.f32 %v334, 1.0
    %v336 = vrcp.pop %v335
    %v337 = vmul.f32 1.0, %v336
    %v338 = vmul.f32 %v330, %v22
    %v339 = vmul.f32 %v324, %v331
    %v340 = vadd.f32 %v338, %v339
    %v341 = vtanh.pop %v340
    %v342 = vmul.f32 %v337, %v341
    %s343 = scalar_lea.vmem %s1, 1024
    %v344 = vld [vmem:[%s343] sm:$0xff]
    %v345 = vld [vmem:[%s343 + $0x8] sm:$0xff]
    %v346 = vld [vmem:[%s343 + $0x10] sm:$0xff]
    %v347 = vld [vmem:[%s343 + $0x18] sm:$0xff]
    %v348 = vld [vmem:[%s343 + $0x20] sm:$0xff]
    %v349 = vld [vmem:[%s343 + $0x28] sm:$0xff]
    %v350 = vld [vmem:[%s343 + $0x30] sm:$0xff]
    %v351 = vld [vmem:[%s343 + $0x38] sm:$0xff]
    %v352 = vld [vmem:[%s343 + $0x40] sm:$0xff]
    %v353 = vld [vmem:[%s343 + $0x48] sm:$0xff]
    %v354 = vld [vmem:[%s343 + $0x50] sm:$0xff]
    %v355 = vld [vmem:[%s343 + $0x58] sm:$0xff]
    %v356 = vld [vmem:[%s343 + $0x60] sm:$0xff]
    %v357 = vld [vmem:[%s343 + $0x68] sm:$0xff]
    %v358 = vld [vmem:[%s343 + $0x70] sm:$0xff]
    %v359 = vld [vmem:[%s343 + $0x78] sm:$0xff]
    %v360 = vld [vmem:[%s343 + $0x80] sm:$0xff]
    %v361 = vld [vmem:[%s343 + $0x88] sm:$0xff]
    %v362 = vld [vmem:[%s343 + $0x90] sm:$0xff]
    %v363 = vld [vmem:[%s343 + $0x98] sm:$0xff]
    %v364 = vld [vmem:[%s343 + $0xa0] sm:$0xff]
    %v365 = vld [vmem:[%s343 + $0xa8] sm:$0xff]
    %v366 = vld [vmem:[%s343 + $0xb0] sm:$0xff]
    %v367 = vld [vmem:[%s343 + $0xb8] sm:$0xff]
    %v368 = vld [vmem:[%s343 + $0xc0] sm:$0xff]
    %v369 = vld [vmem:[%s343 + $0xc8] sm:$0xff]
    %v370 = vld [vmem:[%s343 + $0xd0] sm:$0xff]
    %v371 = vld [vmem:[%s343 + $0xd8] sm:$0xff]
    %v372 = vld [vmem:[%s343 + $0xe0] sm:$0xff]
    %v373 = vld [vmem:[%s343 + $0xe8] sm:$0xff]
    %v374 = vld [vmem:[%s343 + $0xf0] sm:$0xff]
    %v375 = vld [vmem:[%s343 + $0xf8] sm:$0xff]
    %v376 = vld [vmem:[%s343 + $0x100] sm:$0xff]
    %v377 = vld [vmem:[%s343 + $0x108] sm:$0xff]
    %v378 = vld [vmem:[%s343 + $0x110] sm:$0xff]
    %v379 = vld [vmem:[%s343 + $0x118] sm:$0xff]
    %v380 = vld [vmem:[%s343 + $0x120] sm:$0xff]
    %v381 = vld [vmem:[%s343 + $0x128] sm:$0xff]
    %v382 = vld [vmem:[%s343 + $0x130] sm:$0xff]
    %v383 = vld [vmem:[%s343 + $0x138] sm:$0xff]
    %v384 = vld [vmem:[%s343 + $0x140] sm:$0xff]
    %v385 = vld [vmem:[%s343 + $0x148] sm:$0xff]
    %v386 = vld [vmem:[%s343 + $0x150] sm:$0xff]
    %v387 = vld [vmem:[%s343 + $0x158] sm:$0xff]
    %v388 = vld [vmem:[%s343 + $0x160] sm:$0xff]
    %v389 = vld [vmem:[%s343 + $0x168] sm:$0xff]
    %v390 = vld [vmem:[%s343 + $0x170] sm:$0xff]
    %v391 = vld [vmem:[%s343 + $0x178] sm:$0xff]
    %v392 = vld [vmem:[%s343 + $0x180] sm:$0xff]
    %v393 = vld [vmem:[%s343 + $0x188] sm:$0xff]
    %v394 = vld [vmem:[%s343 + $0x190] sm:$0xff]
    %v395 = vld [vmem:[%s343 + $0x198] sm:$0xff]
    %v396 = vld [vmem:[%s343 + $0x1a0] sm:$0xff]
    %v397 = vld [vmem:[%s343 + $0x1a8] sm:$0xff]
    %v398 = vld [vmem:[%s343 + $0x1b0] sm:$0xff]
    %v399 = vld [vmem:[%s343 + $0x1b8] sm:$0xff]
    %v400 = vld [vmem:[%s343 + $0x1c0] sm:$0xff]
    %v401 = vld [vmem:[%s343 + $0x1c8] sm:$0xff]
    %v402 = vld [vmem:[%s343 + $0x1d0] sm:$0xff]
    %v403 = vld [vmem:[%s343 + $0x1d8] sm:$0xff]
    %v404 = vld [vmem:[%s343 + $0x1e0] sm:$0xff]
    %v405 = vld [vmem:[%s343 + $0x1e8] sm:$0xff]
    %v406 = vld [vmem:[%s343 + $0x1f0] sm:$0xff]
    %v407 = vld [vmem:[%s343 + $0x1f8] sm:$0xff]
    %v408 = vld [vmem:[%s343 + $0x200] sm:$0xff]
    %v409 = vld [vmem:[%s343 + $0x208] sm:$0xff]
    %v410 = vld [vmem:[%s343 + $0x210] sm:$0xff]
    %v411 = vld [vmem:[%s343 + $0x218] sm:$0xff]
    %v412 = vld [vmem:[%s343 + $0x220] sm:$0xff]
    %v413 = vld [vmem:[%s343 + $0x228] sm:$0xff]
    %v414 = vld [vmem:[%s343 + $0x230] sm:$0xff]
    %v415 = vld [vmem:[%s343 + $0x238] sm:$0xff]
    %v416 = vld [vmem:[%s343 + $0x240] sm:$0xff]
    %v417 = vld [vmem:[%s343 + $0x248] sm:$0xff]
    %v418 = vld [vmem:[%s343 + $0x250] sm:$0xff]
    %v419 = vld [vmem:[%s343 + $0x258] sm:$0xff]
    %v420 = vld [vmem:[%s343 + $0x260] sm:$0xff]
    %v421 = vld [vmem:[%s343 + $0x268] sm:$0xff]
    %v422 = vld [vmem:[%s343 + $0x270] sm:$0xff]
    %v423 = vld [vmem:[%s343 + $0x278] sm:$0xff]
    %v424 = vld [vmem:[%s343 + $0x280] sm:$0xff]
    %v425 = vld [vmem:[%s343 + $0x288] sm:$0xff]
    %v426 = vld [vmem:[%s343 + $0x290] sm:$0xff]
    %v427 = vld [vmem:[%s343 + $0x298] sm:$0xff]
    %v428 = vld [vmem:[%s343 + $0x2a0] sm:$0xff]
    %v429 = vld [vmem:[%s343 + $0x2a8] sm:$0xff]
    %v430 = vld [vmem:[%s343 + $0x2b0] sm:$0xff]
    %v431 = vld [vmem:[%s343 + $0x2b8] sm:$0xff]
    %v432 = vld [vmem:[%s343 + $0x2c0] sm:$0xff]
    %v433 = vld [vmem:[%s343 + $0x2c8] sm:$0xff]
    %v434 = vld [vmem:[%s343 + $0x2d0] sm:$0xff]
    %v435 = vld [vmem:[%s343 + $0x2d8] sm:$0xff]
    %v436 = vld [vmem:[%s343 + $0x2e0] sm:$0xff]
    %v437 = vld [vmem:[%s343 + $0x2e8] sm:$0xff]
    %v438 = vld [vmem:[%s343 + $0x2f0] sm:$0xff]
    %v439 = vld [vmem:[%s343 + $0x2f8] sm:$0xff]
    %v440 = vld [vmem:[%s343 + $0x300] sm:$0xff]
    %v441 = vld [vmem:[%s343 + $0x308] sm:$0xff]
    %v442 = vld [vmem:[%s343 + $0x310] sm:$0xff]
    %v443 = vld [vmem:[%s343 + $0x318] sm:$0xff]
    %v444 = vld [vmem:[%s343 + $0x320] sm:$0xff]
    %v445 = vld [vmem:[%s343 + $0x328] sm:$0xff]
    %v446 = vld [vmem:[%s343 + $0x330] sm:$0xff]
    %v447 = vld [vmem:[%s343 + $0x338] sm:$0xff]
    %v448 = vld [vmem:[%s343 + $0x340] sm:$0xff]
    %v449 = vld [vmem:[%s343 + $0x348] sm:$0xff]
    %v450 = vld [vmem:[%s343 + $0x350] sm:$0xff]
    %v451 = vld [vmem:[%s343 + $0x358] sm:$0xff]
    %v452 = vld [vmem:[%s343 + $0x360] sm:$0xff]
    %v453 = vld [vmem:[%s343 + $0x368] sm:$0xff]
    %v454 = vld [vmem:[%s343 + $0x370] sm:$0xff]
    %v455 = vld [vmem:[%s343 + $0x378] sm:$0xff]
    %v456 = vld [vmem:[%s343 + $0x380] sm:$0xff]
    %v457 = vld [vmem:[%s343 + $0x388] sm:$0xff]
    %v458 = vld [vmem:[%s343 + $0x390] sm:$0xff]
    %v459 = vld [vmem:[%s343 + $0x398] sm:$0xff]
    %v460 = vld [vmem:[%s343 + $0x3a0] sm:$0xff]
    %v461 = vld [vmem:[%s343 + $0x3a8] sm:$0xff]
    %v462 = vld [vmem:[%s343 + $0x3b0] sm:$0xff]
    %v463 = vld [vmem:[%s343 + $0x3b8] sm:$0xff]
    %v464 = vld [vmem:[%s343 + $0x3c0] sm:$0xff]
    %v465 = vld [vmem:[%s343 + $0x3c8] sm:$0xff]
    %v466 = vld [vmem:[%s343 + $0x3d0] sm:$0xff]
    %v467 = vld [vmem:[%s343 + $0x3d8] sm:$0xff]
    %v468 = vld [vmem:[%s343 + $0x3e0] sm:$0xff]
    %v469 = vld [vmem:[%s343 + $0x3e8] sm:$0xff]
    %v470 = vld [vmem:[%s343 + $0x3f0] sm:$0xff]
    %v471 = vld [vmem:[%s343 + $0x3f8] sm:$0xff]
    %s472 = scalar_lea.vmem %s2, 4
    %v473 = vld [vmem:[%s472] sm:$0xf]
    %v475 = vlaneseq
    %v476 = vshrl.u32 %v475, 7
    %v477 = vsub.s32 0, %v476
    %v478 = vrot.slane %v473, %v477
    %v479 = vlaneseq
    %v480 = vshrl.u32 %v479, 7
    %v481 = vsub.s32 1, %v480
    %v482 = vrot.slane %v473, %v481
    %v483 = vlaneseq
    %v484 = vshrl.u32 %v483, 7
    %v485 = vsub.s32 2, %v484
    %v486 = vrot.slane %v473, %v485
    %v487 = vlaneseq
    %v488 = vshrl.u32 %v487, 7
    %v489 = vsub.s32 3, %v488
    %v490 = vrot.slane %v473, %v489
    %495 = vmatprep.subr.mxu0 %v405
    %496 = vmatpush1.msra.mxu0 %v404
    %497 = vmatprep.subr.mxu0 %v401
    %498 = vmatpush1.msra.mxu0 %v400
    %499 = vmatprep.subr.mxu0 %v397
    %500 = vmatpush1.msra.mxu0 %v396
    %501 = vmatprep.subr.mxu0 %v393
    %502 = vmatpush1.msra.mxu0 %v392
    %503 = vmatprep.subr.mxu0 %v389
    %504 = vmatpush1.msra.mxu0 %v388
    %505 = vmatprep.subr.mxu0 %v385
    %506 = vmatpush1.msra.mxu0 %v384
    %507 = vmatprep.subr.mxu0 %v381
    %508 = vmatpush1.msra.mxu0 %v380
    %509 = vmatprep.subr.mxu0 %v377
    %510 = vmatpush1.msra.mxu0 %v376
    %511 = vmatprep.subr.mxu0 %v373
    %512 = vmatpush1.msra.mxu0 %v372
    %513 = vmatprep.subr.mxu0 %v369
    %514 = vmatpush1.msra.mxu0 %v368
    %515 = vmatprep.subr.mxu0 %v365
    %516 = vmatpush1.msra.mxu0 %v364
    %517 = vmatprep.subr.mxu0 %v361
    %518 = vmatpush1.msra.mxu0 %v360
    %519 = vmatprep.subr.mxu0 %v357
    %520 = vmatpush1.msra.mxu0 %v356
    %521 = vmatprep.subr.mxu0 %v353
    %522 = vmatpush1.msra.mxu0 %v352
    %523 = vmatprep.subr.mxu0 %v349
    %524 = vmatpush1.msra.mxu0 %v348
    %525 = vmatprep.subr.mxu0 %v345
    %526 = vmatpush1.msra.mxu0 %v344
    %527 = vmatprep.subr.mxu0 %v469
    %528 = vmatpush2.msra.mxu0 %v468
    %529 = vmatprep.subr.mxu0 %v465
    %530 = vmatpush2.msra.mxu0 %v464
    %531 = vmatprep.subr.mxu0 %v461
    %532 = vmatpush2.msra.mxu0 %v460
    %533 = vmatprep.subr.mxu0 %v457
    %534 = vmatpush2.msra.mxu0 %v456
    %535 = vmatprep.subr.mxu0 %v453
    %536 = vmatpush2.msra.mxu0 %v452
    %537 = vmatprep.subr.mxu0 %v449
    %538 = vmatpush2.msra.mxu0 %v448
    %539 = vmatprep.subr.mxu0 %v445
    %540 = vmatpush2.msra.mxu0 %v444
    %541 = vmatprep.subr.mxu0 %v441
    %542 = vmatpush2.msra.mxu0 %v440
    %543 = vmatprep.subr.mxu0 %v437
    %544 = vmatpush2.msra.mxu0 %v436
    %545 = vmatprep.subr.mxu0 %v433
    %546 = vmatpush2.msra.mxu0 %v432
    %547 = vmatprep.subr.mxu0 %v429
    %548 = vmatpush2.msra.mxu0 %v428
    %549 = vmatprep.subr.mxu0 %v425
    %550 = vmatpush2.msra.mxu0 %v424
    %551 = vmatprep.subr.mxu0 %v421
    %552 = vmatpush2.msra.mxu0 %v420
    %553 = vmatprep.subr.mxu0 %v417
    %554 = vmatpush2.msra.mxu0 %v416
    %555 = vmatprep.subr.mxu0 %v413
    %556 = vmatpush2.msra.mxu0 %v412
    %557 = vmatprep.subr.mxu0 %v409
    %558 = vmatpush2.msra.mxu0 %v408
    %559 = vmatprep.mubr.f32.mxu0 %v21
    %560 = vmatmul.mubr.f32.gmra.mxu0 %v342
    %v561 = vpop.f32.mrf.mxu0
    %v562 = vadd.f32 %v478, %v561
    %v563 = vpop.f32.mrf.mxu0
    %v564 = vadd.f32 %v482, %v563
    %565 = vdwg.mxu0
    %566 = vmatprep.subr.mxu0 %v407
    %567 = vmatpush1.msra.mxu0 %v406
    %568 = vmatprep.subr.mxu0 %v403
    %569 = vmatpush1.msra.mxu0 %v402
    %570 = vmatprep.subr.mxu0 %v399
    %571 = vmatpush1.msra.mxu0 %v398
    %572 = vmatprep.subr.mxu0 %v395
    %573 = vmatpush1.msra.mxu0 %v394
    %574 = vmatprep.subr.mxu0 %v391
    %575 = vmatpush1.msra.mxu0 %v390
    %576 = vmatprep.subr.mxu0 %v387
    %577 = vmatpush1.msra.mxu0 %v386
    %578 = vmatprep.subr.mxu0 %v383
    %579 = vmatpush1.msra.mxu0 %v382
    %580 = vmatprep.subr.mxu0 %v379
    %581 = vmatpush1.msra.mxu0 %v378
    %582 = vmatprep.subr.mxu0 %v375
    %583 = vmatpush1.msra.mxu0 %v374
    %584 = vmatprep.subr.mxu0 %v371
    %585 = vmatpush1.msra.mxu0 %v370
    %586 = vmatprep.subr.mxu0 %v367
    %587 = vmatpush1.msra.mxu0 %v366
    %588 = vmatprep.subr.mxu0 %v363
    %589 = vmatpush1.msra.mxu0 %v362
    %590 = vmatprep.subr.mxu0 %v359
    %591 = vmatpush1.msra.mxu0 %v358
    %592 = vmatprep.subr.mxu0 %v355
    %593 = vmatpush1.msra.mxu0 %v354
    %594 = vmatprep.subr.mxu0 %v351
    %595 = vmatpush1.msra.mxu0 %v350
    %596 = vmatprep.subr.mxu0 %v347
    %597 = vmatpush1.msra.mxu0 %v346
    %598 = vmatprep.subr.mxu0 %v471
    %599 = vmatpush2.msra.mxu0 %v470
    %600 = vmatprep.subr.mxu0 %v467
    %601 = vmatpush2.msra.mxu0 %v466
    %602 = vmatprep.subr.mxu0 %v463
    %603 = vmatpush2.msra.mxu0 %v462
    %604 = vmatprep.subr.mxu0 %v459
    %605 = vmatpush2.msra.mxu0 %v458
    %606 = vmatprep.subr.mxu0 %v455
    %607 = vmatpush2.msra.mxu0 %v454
    %608 = vmatprep.subr.mxu0 %v451
    %609 = vmatpush2.msra.mxu0 %v450
    %610 = vmatprep.subr.mxu0 %v447
    %611 = vmatpush2.msra.mxu0 %v446
    %612 = vmatprep.subr.mxu0 %v443
    %613 = vmatpush2.msra.mxu0 %v442
    %614 = vmatprep.subr.mxu0 %v439
    %615 = vmatpush2.msra.mxu0 %v438
    %616 = vmatprep.subr.mxu0 %v435
    %617 = vmatpush2.msra.mxu0 %v434
    %618 = vmatprep.subr.mxu0 %v431
    %619 = vmatpush2.msra.mxu0 %v430
    %620 = vmatprep.subr.mxu0 %v427
    %621 = vmatpush2.msra.mxu0 %v426
    %622 = vmatprep.subr.mxu0 %v423
    %623 = vmatpush2.msra.mxu0 %v422
    %624 = vmatprep.subr.mxu0 %v419
    %625 = vmatpush2.msra.mxu0 %v418
    %626 = vmatprep.subr.mxu0 %v415
    %627 = vmatpush2.msra.mxu0 %v414
    %628 = vmatprep.subr.mxu0 %v411
    %629 = vmatpush2.msra.mxu0 %v410
    %630 = vmatprep.mubr.f32.mxu0 %v21
    %631 = vmatmul.mubr.f32.gmra.mxu0 %v342
    %v632 = vpop.f32.mrf.mxu0
    %v633 = vadd.f32 %v486, %v632
    %v634 = vpop.f32.mrf.mxu0
    %v635 = vadd.f32 %v490, %v634
    %636 = vdwg.mxu0
    %v637 = vxor.u32 %v562, 2147483648
    %v638 = vmul.f32 %v637, 1.442695
    %v639 = vpow.pop %v638
    %v640 = vadd.f32 %v639, 1.0
    %v641 = vrcp.pop %v640
    %v642 = vmul.f32 1.0, %v641
    %v643 = vxor.u32 %v564, 2147483648
    %v644 = vmul.f32 %v643, 1.442695
    %v645 = vpow.pop %v644
    %v646 = vadd.f32 %v645, 1.0
    %v647 = vrcp.pop %v646
    %v648 = vmul.f32 1.0, %v647
    %v649 = vtanh.pop %v633
    %v650 = vxor.u32 %v635, 2147483648
    %v651 = vmul.f32 %v650, 1.442695
    %v652 = vpow.pop %v651
    %v653 = vadd.f32 %v652, 1.0
    %v654 = vrcp.pop %v653
    %v655 = vmul.f32 1.0, %v654
    %v656 = vmul.f32 %v648, %v23
    %v657 = vmul.f32 %v642, %v649
    %v658 = vadd.f32 %v656, %v657
    %v659 = vtanh.pop %v658
    %v660 = vmul.f32 %v655, %v659
    %s661 = scalar_lea.vmem %s3, %s24
    %662 = vst [vmem:[%s661] sm:$0xff] %v660
  $region18: #{decoder_forward_pallas.2} parent=0 // loop_footer
    %s19 = sadd.s32 1, %s15
  $region19: #{decoder_forward_pallas.2} parent=0 // loop_footer_branch
    %14 = sbr.rel target = $region15
  $region20: #{decoder_forward_pallas.2} parent=0 // loop_exit
    _
  // Predicated region
  $region21: #{decoder_forward_pallas.2} parent=0 // pred_check
    _
  $region22: #{decoder_forward_pallas.2} parent=0 // pred_check_branch
    %664 = sbr.rel (0) target = $region24
  $region23: #{decoder_forward_pallas.2} parent=0 // pred_region
    _
  $region24: #{decoder_forward_pallas.2} parent=0 // pred_fallthru
    _
  // Predicated region
  $region25: #{decoder_forward_pallas.2} parent=0 // pred_check
    _
  $region26: #{decoder_forward_pallas.2} parent=0 // pred_check_branch
    %666 = sbr.rel (0) target = $region28
  $region27: #{decoder_forward_pallas.2} parent=0 // pred_region
    _
  $region28: #{decoder_forward_pallas.2} parent=0 // pred_fallthru
    _

</llo_original>
